<compile_context>
chip_gen: v7x
topology: tpu7x:2x2x1
jax: 0.10.0
libtpu: 0.0.40
codegen_flags: <defaults>
</compile_context>

<pallas_src>
import functools

import jax
import jax.numpy as jnp
from jax.experimental import pallas as pl
from jax.experimental.pallas import tpu as pltpu


def _triplet_loss_kernel(a_ref, p_ref, n_ref, out_ref, *,
                         margin, total_b, tile_b, ragged):
    a = a_ref[...].astype(jnp.float32)
    p = p_ref[...].astype(jnp.float32)
    n = n_ref[...].astype(jnp.float32)

    # (a - p)^2 - (a - n)^2  ==  (p - n) * (p + n - 2a)  -> single reduction.
    diff = jnp.sum((p - n) * (p + n - 2.0 * a), axis=1, keepdims=True)  # (TB, 1)
    losses = jnp.maximum(diff + jnp.float32(margin), 0.0)               # (TB, 1)

    if ragged:
        # Only the last tile overruns the batch; only it pays the mask.
        i = pl.program_id(0)
        is_last = i == pl.num_programs(0) - 1

        @pl.when(jnp.logical_not(is_last))
        def _():
            out_ref[...] = jnp.sum(losses, axis=0, keepdims=True).reshape(1, 1, 1)

        @pl.when(is_last)
        def _():
            # Rows past total_b contain unspecified data (no wrapper pad);
            # the select zeroes them even if they are NaN/Inf.
            row = i * tile_b + jax.lax.broadcasted_iota(jnp.int32, losses.shape, 0)
            masked = jnp.where(row < total_b, losses, 0.0)
            out_ref[...] = jnp.sum(masked, axis=0, keepdims=True).reshape(1, 1, 1)
    else:
        out_ref[...] = jnp.sum(losses, axis=0, keepdims=True).reshape(1, 1, 1)


def _sublane_multiple(dtype):
    # Native sublane packing: 8 rows for 32-bit, 16 for bf16, 32 for int8/fp8.
    itemsize = jnp.dtype(dtype).itemsize
    return max(8, 32 // max(int(itemsize), 1))


def _default_tile_b(d, itemsize, sub):
    # VMEM footprint of the pipelined inputs, with the feature dim padded to
    # the 128-lane tile: 3 inputs x 2 pipeline buffers x TB x D_pad x itemsize.
    d_pad = ((max(int(d), 1) + 127) // 128) * 128
    budget_bytes = 24 * 1024 * 1024
    rows = budget_bytes // (3 * 2 * d_pad * int(itemsize))
    rows = min(rows, 2048)                    # HBM-BW plateau; amortizes grid-step cost
    return max(sub, (rows // sub) * sub)      # native sublane multiple


def triplet_loss(anchor, positive, negative, margin, *, tile_b=None):
    """Pallas equivalent of TripletLoss(margin)(anchor, positive, negative)."""
    assert anchor.shape == positive.shape == negative.shape
    assert anchor.ndim == 2
    b, d = anchor.shape
    assert b > 0, "batch must be non-empty (mean over 0 elements is undefined)"

    itemsize = jnp.dtype(anchor.dtype).itemsize
    sub = _sublane_multiple(anchor.dtype)
    if tile_b is None:
        tile_b = _default_tile_b(d, itemsize, sub)
    tile_b = max(sub, ((int(tile_b) + sub - 1) // sub) * sub)  # sublane multiple
    tile_b = min(tile_b, ((b + sub - 1) // sub) * sub)         # don't exceed batch

    num_tiles = (b + tile_b - 1) // tile_b     # ragged trailing block, no jnp.pad
    ragged = (b % tile_b) != 0

    kernel = functools.partial(
        _triplet_loss_kernel,
        margin=float(margin), total_b=int(b), tile_b=int(tile_b), ragged=ragged)

    in_spec = pl.BlockSpec((tile_b, d), lambda i: (i, 0))

    # Explicit scoped-VMEM limit sized from the real (lane-padded) buffers:
    # works under v5e's 16 MiB default and stays below v7x's 64 MiB physical.
    d_pad = ((d + 127) // 128) * 128
    in_buf_bytes = 3 * 2 * tile_b * d_pad * itemsize
    vmem_limit = int(min(max(in_buf_bytes + (8 << 20), 16 << 20), 48 << 20))

    partials = pl.pallas_call(
        kernel,
        out_shape=jax.ShapeDtypeStruct((num_tiles, 1, 1), jnp.float32),
        grid_spec=pltpu.PrefetchScalarGridSpec(
            num_scalar_prefetch=0,
            grid=(num_tiles,),
            in_specs=[in_spec, in_spec, in_spec],
            out_specs=pl.BlockSpec((1, 1, 1), lambda i: (i, 0, 0)),
        ),
        compiler_params=pltpu.CompilerParams(
            dimension_semantics=("parallel",),
            vmem_limit_bytes=vmem_limit),
        cost_estimate=pl.CostEstimate(
            flops=5 * int(b) * int(d),
            transcendentals=0,
            bytes_accessed=3 * int(b) * int(d) * int(itemsize) + num_tiles * 4),
    )(anchor, positive, negative)

    # Mean over the GLOBAL batch; per-tile partials are summed in plain JAX.
    return jnp.sum(partials) / jnp.float32(b)


if __name__ == "__main__":
    margin = 1.0

    def ref_loss(a, p, n):
        dp = jnp.sum((a - p) ** 2, axis=1)
        dn = jnp.sum((a - n) ** 2, axis=1)
        return jnp.mean(jnp.maximum(dp - dn + margin, 0.0))

    key = jax.random.PRNGKey(0)
    k1a, k1p, k1n, k2a, k2p, k2n = jax.random.split(key, 6)

    # Case 1: small aligned batch -> single tile, non-ragged path.
    B, D = 8, 32
    anchor = jax.random.normal(k1a, (B, D), dtype=jnp.float32)
    positive = jax.random.normal(k1p, (B, D), dtype=jnp.float32)
    negative = jax.random.normal(k1n, (B, D), dtype=jnp.float32)
    loss = triplet_loss(anchor, positive, negative, margin)
    jax.block_until_ready(loss)
    ref = ref_loss(anchor, positive, negative)
    assert jnp.allclose(loss, ref, rtol=1e-5, atol=1e-4), (loss, ref)

    # Case 2: ragged batch with a forced small tile -> multi-tile parallel
    # grid, exercises per-tile partial outputs and the last-tile row mask
    # (no wrapper-side padding of the inputs).
    B2 = 20
    a2 = jax.random.normal(k2a, (B2, D), dtype=jnp.float32)
    p2 = jax.random.normal(k2p, (B2, D), dtype=jnp.float32)
    n2 = jax.random.normal(k2n, (B2, D), dtype=jnp.float32)
    loss2 = triplet_loss(a2, p2, n2, margin, tile_b=8)
    jax.block_until_ready(loss2)
    ref2 = ref_loss(a2, p2, n2)
    assert jnp.allclose(loss2, ref2, rtol=1e-5, atol=1e-4), (loss2, ref2)

    print("KERNEL_OK")
</pallas_src>

<mosaic_0001>
module attributes {stable_mosaic.version = 11 : i64} {
  func.func @_triplet_loss_kernel(%arg0: i32, %arg1: memref<8x32xf32, #tpu.memory_space<vmem>>, %arg2: memref<8x32xf32, #tpu.memory_space<vmem>>, %arg3: memref<8x32xf32, #tpu.memory_space<vmem>>, %arg4: memref<1x1x1xf32, #tpu.memory_space<vmem>>) attributes {dimension_semantics = [#tpu.dimension_semantics<parallel>], iteration_bounds = array<i64: 1>, scalar_prefetch = 0 : i64, scratch_operands = 0 : i64, tpu.core_type = #tpu.core_type<tc>, window_params = [{transform_indices = @transform_0, window_bounds = array<i64: 8, 32>}, {transform_indices = @transform_1, window_bounds = array<i64: 8, 32>}, {transform_indices = @transform_2, window_bounds = array<i64: 8, 32>}, {transform_indices = @transform_3, window_bounds = array<i64: 1, 1, 1>}]} {
    %c0 = arith.constant 0 : index
    %c0_0 = arith.constant 0 : index
    %0 = vector.load %arg1[%c0, %c0_0] : memref<8x32xf32, #tpu.memory_space<vmem>>, vector<8x32xf32>
    %c0_1 = arith.constant 0 : index
    %c0_2 = arith.constant 0 : index
    %1 = vector.load %arg2[%c0_1, %c0_2] : memref<8x32xf32, #tpu.memory_space<vmem>>, vector<8x32xf32>
    %c0_3 = arith.constant 0 : index
    %c0_4 = arith.constant 0 : index
    %2 = vector.load %arg3[%c0_3, %c0_4] : memref<8x32xf32, #tpu.memory_space<vmem>>, vector<8x32xf32>
    %3 = arith.subf %1, %2 : vector<8x32xf32>
    %4 = arith.addf %1, %2 : vector<8x32xf32>
    %cst = arith.constant 2.000000e+00 : f32
    %5 = vector.broadcast %cst : f32 to vector<8x32xf32>
    %6 = arith.mulf %5, %0 : vector<8x32xf32>
    %7 = arith.subf %4, %6 : vector<8x32xf32>
    %8 = arith.mulf %3, %7 : vector<8x32xf32>
    %cst_5 = arith.constant dense<0.000000e+00> : vector<8xf32>
    %9 = vector.multi_reduction <add>, %8, %cst_5 [1] : vector<8x32xf32> to vector<8xf32>
    %10 = vector.shape_cast %9 : vector<8xf32> to vector<8x1xf32>
    %cst_6 = arith.constant 1.000000e+00 : f32
    %11 = vector.broadcast %cst_6 : f32 to vector<8x1xf32>
    %12 = arith.addf %10, %11 : vector<8x1xf32>
    %cst_7 = arith.constant 0.000000e+00 : f32
    %13 = vector.broadcast %cst_7 : f32 to vector<8x1xf32>
    %14 = arith.maximumf %12, %13 : vector<8x1xf32>
    %cst_8 = arith.constant dense<0.000000e+00> : vector<1xf32>
    %15 = vector.multi_reduction <add>, %14, %cst_8 [0] : vector<8x1xf32> to vector<1xf32>
    %16 = vector.shape_cast %15 : vector<1xf32> to vector<1x1xf32>
    %17 = vector.shape_cast %16 : vector<1x1xf32> to vector<1x1x1xf32>
    %c0_9 = arith.constant 0 : index
    %c0_10 = arith.constant 0 : index
    %c0_11 = arith.constant 0 : index
    %18 = vector.load %arg4[%c0_9, %c0_10, %c0_11] : memref<1x1x1xf32, #tpu.memory_space<vmem>>, vector<1x1x1xf32>
    tpu.vector_store %arg4[%c0_9, %c0_10, %c0_11], %17 {strides = array<i32>} : memref<1x1x1xf32, #tpu.memory_space<vmem>>, vector<1x1x1xf32>,
    return
  }
  func.func @transform_0(%arg0: i32) -> (i32, i32) {
    %c0_i32 = arith.constant 0 : i32
    %c0_i32_0 = arith.constant 0 : i32
    return %arg0, %c0_i32 : i32, i32
  }
  func.func @transform_1(%arg0: i32) -> (i32, i32) {
    %c0_i32 = arith.constant 0 : i32
    %c0_i32_0 = arith.constant 0 : i32
    return %arg0, %c0_i32 : i32, i32
  }
  func.func @transform_2(%arg0: i32) -> (i32, i32) {
    %c0_i32 = arith.constant 0 : i32
    %c0_i32_0 = arith.constant 0 : i32
    return %arg0, %c0_i32 : i32, i32
  }
  func.func @transform_3(%arg0: i32) -> (i32, i32, i32) {
    %c0_i32 = arith.constant 0 : i32
    %c0_i32_0 = arith.constant 0 : i32
    %c0_i32_1 = arith.constant 0 : i32
    return %arg0, %c0_i32, %c0_i32_0 : i32, i32, i32
  }
}

</mosaic_0001>

<llo_original>
// kernel: tpu_custom_call.1
$region0: #{tpu_custom_call.1}
  #allocation0 [shape = 'u32[]', space=smem, size = 0x4, offset = 0x4, fixed_abs, tag = 'smem constant byte address 0x4 - core index']
  #allocation1 [shape = 'u32[144,128]{1,0:T(1,128)}', space=vmem, size = 0x12000, scoped, tag = 'internal scratch']
  %s0 = inlined_call_operand.hbm [shape: f32[8,32], index: 0, kind: input, shape index: {}]
  %s1 = inlined_call_operand.hbm [shape: f32[8,32], index: 1, kind: input, shape index: {}]
  %s2 = inlined_call_operand.hbm [shape: f32[8,32], index: 2, kind: input, shape index: {}]
  %s3 = inlined_call_operand.hbm [shape: f32[1,1,1], index: 3, kind: output, shape index: {}]
  %s4 = sld [smem:[#allocation0]]
  $region34: #{tpu_custom_call.1} parent=0
    _
  %s6 = ssub.s32 1, %s4
  %s7 = scalar_select 0, %s6, %s4
  $region1: #{tpu_custom_call.1} parent=0
    #allocation2 [shape = 'u8[4096]{0}', space=vmem, size = 0x1000, scoped, tag = 'input window, operand 0, single buffered']
    #allocation3 [shape = 's32[1]{0}', space=sflag, size = 0x4, scoped, tag = 'scoped memory for tpu_custom_call.1']
    #allocation4 [shape = 's32[1]{0}', space=sflag, size = 0x4, scoped, tag = 'scoped memory for tpu_custom_call.1']
    #allocation5 [shape = 'u8[4096]{0}', space=vmem, size = 0x1000, scoped, tag = 'input window, operand 1, single buffered']
    #allocation6 [shape = 's32[1]{0}', space=sflag, size = 0x4, scoped, tag = 'scoped memory for tpu_custom_call.1']
    #allocation7 [shape = 'u8[4096]{0}', space=vmem, size = 0x1000, scoped, tag = 'input window, operand 2, single buffered']
    #allocation8 [shape = 'u8[512]{0}', space=vmem, size = 0x400, scoped, tag = 'output window, operand 0, single buffered']
    %8 = vsyncpa [#allocation3], 0
    %9 = vsyncpa [#allocation6], 0
    %10 = vsyncpa [#allocation4], 0
    // Predicated region
    $region2: #{tpu_custom_call.1} parent=1 // pred_check
      _
    $region3: #{tpu_custom_call.1} parent=1 // pred_check_branch
      %12 = sbr.rel (0) target = $region5
    $region4: #{tpu_custom_call.1} parent=1 // pred_region
      %s14 = ssub.s32 128, 128
      %15 = vsyncadd [#allocation3], %s14
      %s17 = sshll.u32 [#allocation2], 4
      %s18 = int_to_ptr.vmem [resolvable:$true] %s17
      %20 = dma.hbm_to_vmem [thread:$0]  %s0, 128, %s18, [#allocation3]
    $region5: #{tpu_custom_call.1} parent=1 // pred_fallthru
      _
    // Predicated region
    $region6: #{tpu_custom_call.1} parent=1 // pred_check
      _
    $region7: #{tpu_custom_call.1} parent=1 // pred_check_branch
      %22 = sbr.rel (0) target = $region9
    $region8: #{tpu_custom_call.1} parent=1 // pred_region
      %s24 = ssub.s32 128, 128
      %25 = vsyncadd [#allocation6], %s24
      %s27 = sshll.u32 [#allocation5], 4
      %s28 = int_to_ptr.vmem [resolvable:$true] %s27
      %30 = dma.hbm_to_vmem [thread:$0]  %s1, 128, %s28, [#allocation6]
    $region9: #{tpu_custom_call.1} parent=1 // pred_fallthru
      _
    // Predicated region
    $region10: #{tpu_custom_call.1} parent=1 // pred_check
      _
    $region11: #{tpu_custom_call.1} parent=1 // pred_check_branch
      %32 = sbr.rel (0) target = $region13
    $region12: #{tpu_custom_call.1} parent=1 // pred_region
      %s34 = ssub.s32 128, 128
      %35 = vsyncadd [#allocation6], %s34
      %s37 = sshll.u32 [#allocation7], 4
      %s38 = int_to_ptr.vmem [resolvable:$true] %s37
      %40 = dma.hbm_to_vmem [thread:$0]  %s2, 128, %s38, [#allocation6]
    $region13: #{tpu_custom_call.1} parent=1 // pred_fallthru
      _
    // Predicated region
    $region14: #{tpu_custom_call.1} parent=1 // pred_check
      _
    $region15: #{tpu_custom_call.1} parent=1 // pred_check_branch
      %42 = sbr.rel (0) target = $region17
    $region16: #{tpu_custom_call.1} parent=1 // pred_region
      %43 = dma.done [#allocation3], 128
    $region17: #{tpu_custom_call.1} parent=1 // pred_fallthru
      _
    // Predicated region
    $region18: #{tpu_custom_call.1} parent=1 // pred_check
      _
    $region19: #{tpu_custom_call.1} parent=1 // pred_check_branch
      %45 = sbr.rel (0) target = $region21
    $region20: #{tpu_custom_call.1} parent=1 // pred_region
      %46 = dma.done [#allocation6], 128
    $region21: #{tpu_custom_call.1} parent=1 // pred_fallthru
      _
    // Predicated region
    $region22: #{tpu_custom_call.1} parent=1 // pred_check
      _
    $region23: #{tpu_custom_call.1} parent=1 // pred_check_branch
      %48 = sbr.rel (0) target = $region25
    $region24: #{tpu_custom_call.1} parent=1 // pred_region
      %49 = dma.done [#allocation6], 128
    $region25: #{tpu_custom_call.1} parent=1 // pred_fallthru
      _
    %v50 = vld [vmem:[#allocation2] sm:$0xff]
    %v51 = vld [vmem:[#allocation5] sm:$0xff]
    %v52 = vld [vmem:[#allocation7] sm:$0xff]
    %v53 = vsub.f32 %v51, %v52
    %v54 = vadd.f32 %v51, %v52
    %v55 = vmul.f32 %v50, 2.0
    %v56 = vsub.f32 %v54, %v55
    %v57 = vmul.f32 %v53, %v56
    %vm58 = vcmask 261120
    %v59 = vsel %vm58, %v57, 0.0
    %60 = vadd.xlane.f32.xlu0 %v59
    %v61 = vpop.xlane.xlu0 %60
    %v62 = vadd.f32 %v61, 1.0
    %v63 = vmax.f32 %v62, 0.0
    %v64 = vrot.slane %v63, 4
    %v65 = vadd.f32 %v63, %v64
    %v66 = vrot.slane %v65, 2
    %v67 = vadd.f32 %v65, %v66
    %v68 = vrot.slane %v67, 1
    %v69 = vadd.f32 %v67, %v68
    %vm70 = vcmask 0
    %71 = vst.msk [vmem:[#allocation8] sm:$0x1] %vm70, %v69
    // Predicated region
    $region26: #{tpu_custom_call.1} parent=1 // pred_check
      _
    $region27: #{tpu_custom_call.1} parent=1 // pred_check_branch
      %73 = sbr.rel (0) target = $region29
    $region28: #{tpu_custom_call.1} parent=1 // pred_region
      %s75 = ssub.s32 16, 16
      %76 = vsyncadd [#allocation4], %s75
      %s78 = sshll.u32 [#allocation8], 4
      %s79 = int_to_ptr.vmem [resolvable:$true] %s78
      %81 = dma.vmem_to_hbm [thread:$0]  %s79, 16, %s3, [#allocation4]
    $region29: #{tpu_custom_call.1} parent=1 // pred_fallthru
      _
    // Predicated region
    $region30: #{tpu_custom_call.1} parent=1 // pred_check
      _
    $region31: #{tpu_custom_call.1} parent=1 // pred_check_branch
      %83 = sbr.rel (0) target = $region33
    $region32: #{tpu_custom_call.1} parent=1 // pred_region
      %84 = dma.done [#allocation4], 16
    $region33: #{tpu_custom_call.1} parent=1 // pred_fallthru
      _
    %85 = vsyncpa [#allocation3], 1
    %86 = vsyncpa [#allocation6], 1
    %87 = vsyncpa [#allocation4], 1

</llo_original>
